<compile_context>
chip_gen: v7x
topology: tpu7x:2x2x1
jax: 0.10.0
libtpu: 0.0.40
codegen_flags: <defaults>
</compile_context>

<pallas_src>
import jax
import jax.numpy as jnp
from jax.experimental import pallas as pl
from jax.experimental.pallas import tpu as pltpu

_LANES = 128
_SUBLANES = 8
_MAX_TILE_ROWS = 4096                 # 4096*128*4B = 2 MiB per f32 buffer
_MIN_PALLAS_ELEMS = _SUBLANES * _LANES  # below one vreg, just let XLA do it


def _ap2_kernel(scale_ref, x_ref, g_ref, o_ref):
    # out = x - (lr / numel) * grad   (elementwise, VPU), computed in the
    # promoted output dtype (f32 for f32 inputs, native bf16 for bf16 inputs).
    s = scale_ref[0].astype(o_ref.dtype)
    o_ref[...] = x_ref[...].astype(o_ref.dtype) - s * g_ref[...].astype(o_ref.dtype)


def _round_up(n, m):
    return ((n + m - 1) // m) * m


def _ap2_update(x, grad, lr):
    """AP2.forward: x - (lr / x.size) * grad, in torch-promoted dtype."""
    orig_shape = x.shape
    total = x.size
    # torch promotion: (input dtype) op (grad buffer dtype); the Python-float
    # scale does not promote tensors in torch, so it is excluded here.
    out_dtype = jnp.promote_types(x.dtype, grad.dtype)

    # Runtime scalar -> no retrace when the lr schedule changes.
    scale = (jnp.asarray(lr, jnp.float32) / jnp.float32(total)).reshape(1)

    n_aligned = (total // _LANES) * _LANES

    if n_aligned < _MIN_PALLAS_ELEMS:
        # Tiny tensors: pallas_call launch overhead >> the actual work.
        return (x.astype(out_dtype)
                - scale[0].astype(out_dtype) * grad.astype(out_dtype))

    x_flat = x.reshape(-1)
    g_flat = grad.reshape(-1)

    rows = n_aligned // _LANES

    # >= 2 grid steps whenever possible so the "parallel" axis can be split
    # across v7x's two TensorCores; tile capped at 2 MiB/f32 buffer so
    # 3 buffers x 2 (double-buffering) stays under every chip's scoped VMEM.
    if rows >= 2 * _SUBLANES:
        tile_rows = min(_MAX_TILE_ROWS, _round_up(pl.cdiv(rows, 2), _SUBLANES))
    else:
        tile_rows = rows  # full extent (allowed even if not a multiple of 8)
    grid = (pl.cdiv(rows, tile_rows),)

    if n_aligned == total:
        x2 = x_flat.reshape(rows, _LANES)
        g2 = g_flat.reshape(rows, _LANES)
    else:
        x2 = x_flat[:n_aligned].reshape(rows, _LANES)
        g2 = g_flat[:n_aligned].reshape(rows, _LANES)

    bytes_accessed = n_aligned * (x.dtype.itemsize
                                  + grad.dtype.itemsize
                                  + jnp.dtype(out_dtype).itemsize)

    out2 = pl.pallas_call(
        _ap2_kernel,
        out_shape=jax.ShapeDtypeStruct((rows, _LANES), out_dtype),
        grid=grid,
        in_specs=[
            pl.BlockSpec(memory_space=pltpu.MemorySpace.SMEM),   # scale (1,)
            pl.BlockSpec((tile_rows, _LANES), lambda i: (i, 0)),
            pl.BlockSpec((tile_rows, _LANES), lambda i: (i, 0)),
        ],
        out_specs=pl.BlockSpec((tile_rows, _LANES), lambda i: (i, 0)),
        compiler_params=pltpu.CompilerParams(
            dimension_semantics=("parallel",),
            vmem_limit_bytes=32 * 1024 * 1024,
        ),
        cost_estimate=pl.CostEstimate(
            flops=2 * n_aligned,
            transcendentals=0,
            bytes_accessed=bytes_accessed,
        ),
    )(scale, x2, g2)

    if n_aligned == total:
        return out2.reshape(orig_shape)

    # Sub-128-element tail: tiny fused XLA expression (no full-tensor pad).
    x_tail = x_flat[n_aligned:]
    g_tail = g_flat[n_aligned:]
    tail = (x_tail.astype(out_dtype)
            - scale[0].astype(out_dtype) * g_tail.astype(out_dtype))
    return jnp.concatenate([out2.reshape(-1), tail]).reshape(orig_shape)


# Jit so the (rare) tail path / reshapes fuse and dispatch overhead vanishes.
# lr is a traced scalar argument -> one compile per (shape, dtype), not per lr.
_ap2_update_jit = jax.jit(_ap2_update)


class SOAP:
    """JAX/Pallas port of the PyTorch SOAP module (forward pass only)."""

    def __init__(self, lr=0.01, curvature_bias=0.001):
        self.lr = lr
        self.curvature_bias = curvature_bias
        self.is_first = True
        self.eval_count = 0
        self.training = True
        self.grad = None  # buffer registered lazily, like register_buffer

    def __call__(self, x):
        if not self.training:
            return x
        self.eval_count += 1
        if self.eval_count < 11:
            return x
        if self.is_first:
            self.is_first = False
            if self.grad is None or self.grad.shape != x.shape:
                # torch.zeros(*input.shape) -> float32 zeros buffer.
                # (Keeping f32 to match torch even for bf16 inputs; storing it
                # in x.dtype would cut AP2's HBM traffic by ~1/3 but deviate.)
                self.grad = jnp.zeros(x.shape, jnp.float32)
            # AP1.forward(input, grad) == input (grad only saved for backward).
            # TODO(synk): AP1/AP2 backward (grad buffer copy_ and curvature
            # preconditioning) is autograd-only and not part of forward.
            return x
        else:
            self.is_first = True
            # AP2.forward: input - (lr / grad.numel()) * grad  (Pallas kernel)
            return _ap2_update_jit(x, self.grad, self.lr)


if __name__ == "__main__":
    key = jax.random.PRNGKey(0)
    kx, kg = jax.random.split(key)
    x = jax.random.normal(kx, (2, 4, 16, 16), dtype=jnp.float32)

    soap = SOAP(lr=0.01, curvature_bias=0.001)
    soap.training = True

    # Calls 1..10: identity warm-up path.
    for _ in range(10):
        out = soap(x)
        assert out.shape == x.shape

    # Call 11: AP1 path -> identity, grad buffer (zeros) registered.
    out11 = soap(x)
    assert jnp.array_equal(out11, x)
    assert soap.grad is not None and soap.grad.shape == x.shape

    # Call 12: AP2 path with zero grad -> equals input.
    out12 = jax.block_until_ready(soap(x))
    assert out12.shape == x.shape and out12.dtype == x.dtype
    assert jnp.allclose(out12, x, atol=0.0), "AP2 with zero grad should be identity"

    # Simulate the backward having written a real gradient into the buffer
    # (AP1.backward does grad.copy_(grad_output)), then run AP1 -> AP2 again.
    g = jax.random.normal(kg, x.shape, dtype=jnp.float32)
    soap.grad = g
    _ = soap(x)                             # call 13: AP1 identity
    out14 = jax.block_until_ready(soap(x))  # call 14: AP2 with nonzero grad

    ref = x - (soap.lr / x.size) * g
    assert out14.shape == x.shape and out14.dtype == x.dtype
    assert jnp.allclose(out14, ref, atol=1e-6, rtol=1e-6), "AP2 mismatch vs reference"

    # Changing lr must NOT retrace (scale is runtime data, not a baked const).
    soap.lr = 0.02
    _ = soap(x)                             # call 15: AP1 identity
    out16 = jax.block_until_ready(soap(x))  # call 16: AP2 with new lr
    ref2 = x - (soap.lr / x.size) * g
    assert jnp.allclose(out16, ref2, atol=1e-6, rtol=1e-6), "AP2 mismatch after lr change"

    print("KERNEL_OK")
</pallas_src>

<mosaic_0001>
module attributes {stable_mosaic.version = 11 : i64} {
  func.func @_ap2_kernel(%arg0: i32, %arg1: memref<1xf32, #tpu.memory_space<smem>>, %arg2: memref<8x128xf32, #tpu.memory_space<vmem>>, %arg3: memref<8x128xf32, #tpu.memory_space<vmem>>, %arg4: memref<8x128xf32, #tpu.memory_space<vmem>>) attributes {dimension_semantics = [#tpu.dimension_semantics<parallel>], iteration_bounds = array<i64: 2>, scalar_prefetch = 0 : i64, scratch_operands = 0 : i64, tpu.core_type = #tpu.core_type<tc>, window_params = [{transform_indices = @transform_0, window_bounds = array<i64: 1>}, {transform_indices = @transform_1, window_bounds = array<i64: 8, 128>}, {transform_indices = @transform_2, window_bounds = array<i64: 8, 128>}, {transform_indices = @transform_3, window_bounds = array<i64: 8, 128>}]} {
    %c0 = arith.constant 0 : index
    %0 = memref.load %arg1[%c0] : memref<1xf32, #tpu.memory_space<smem>>
    %c0_0 = arith.constant 0 : index
    %c0_1 = arith.constant 0 : index
    %1 = vector.load %arg2[%c0_0, %c0_1] : memref<8x128xf32, #tpu.memory_space<vmem>>, vector<8x128xf32>
    %c0_2 = arith.constant 0 : index
    %c0_3 = arith.constant 0 : index
    %2 = vector.load %arg3[%c0_2, %c0_3] : memref<8x128xf32, #tpu.memory_space<vmem>>, vector<8x128xf32>
    %3 = vector.broadcast %0 : f32 to vector<8x128xf32>
    %4 = arith.mulf %3, %2 : vector<8x128xf32>
    %5 = arith.subf %1, %4 : vector<8x128xf32>
    %c0_4 = arith.constant 0 : index
    %c0_5 = arith.constant 0 : index
    %6 = vector.load %arg4[%c0_4, %c0_5] : memref<8x128xf32, #tpu.memory_space<vmem>>, vector<8x128xf32>
    tpu.vector_store %arg4[%c0_4, %c0_5], %5 {strides = array<i32>} : memref<8x128xf32, #tpu.memory_space<vmem>>, vector<8x128xf32>,
    return
  }
  func.func @transform_0(%arg0: i32) -> i32 {
    %c0_i32 = arith.constant 0 : i32
    %c0_i32_0 = arith.constant 0 : i32
    return %c0_i32 : i32
  }
  func.func @transform_1(%arg0: i32) -> (i32, i32) {
    %c0_i32 = arith.constant 0 : i32
    %c0_i32_0 = arith.constant 0 : i32
    return %arg0, %c0_i32 : i32, i32
  }
  func.func @transform_2(%arg0: i32) -> (i32, i32) {
    %c0_i32 = arith.constant 0 : i32
    %c0_i32_0 = arith.constant 0 : i32
    return %arg0, %c0_i32 : i32, i32
  }
  func.func @transform_3(%arg0: i32) -> (i32, i32) {
    %c0_i32 = arith.constant 0 : i32
    %c0_i32_0 = arith.constant 0 : i32
    return %arg0, %c0_i32 : i32, i32
  }
}

</mosaic_0001>

<llo_original>
// kernel: _ap2_update.1
$region0: #{_ap2_update.1}
  #allocation0 [shape = 'u32[]', space=smem, size = 0x4, offset = 0x4, fixed_abs, tag = 'smem constant byte address 0x4 - core index']
  #allocation1 [shape = 'u32[144,128]{1,0:T(1,128)}', space=vmem, size = 0x12000, scoped, tag = 'internal scratch']
  #allocation2 [shape = 'f32[1]{0:T(128)S(6)}', space=smem, size = 0x200, scoped, tag = 'scoped memory for _ap2_update.1']
  %s0 = inlined_call_operand.<no memory space> [shape: f32[1], index: 0, kind: input, shape index: {}]
  %s1 = inlined_call_operand.vmem [shape: f32[16,128], index: 1, kind: input, shape index: {}]
  %s2 = inlined_call_operand.vmem [shape: f32[16,128], index: 2, kind: input, shape index: {}]
  %s3 = inlined_call_operand.vmem [shape: f32[16,128], index: 3, kind: output, shape index: {}]
  %s4 = sld [smem:[#allocation0]]
  $region45: #{_ap2_update.1} parent=0
    _
  %s6 = ssub.s32 1, %s4
  %s7 = scalar_select 0, %s6, %s4
  %8 = sst [smem:[#allocation2]] %s0
  loop: start=0, step=1, limit=4
  $region2: #{_ap2_update.1} parent=0 // loop_pre_header
    _
  $region3: #{_ap2_update.1} parent=0 // loop_header
    %s10 = sphi 0, %s14
    %p11 = scmp.ge.s32.totalorder %s10, 4
    %s18 = sphi 0, %s18
    %s20 = sphi 0, %s18
    %s21 = sphi 0, %s20
    %s35 = sphi 0, %s21
    %s41 = sphi 0, %s43
    %s44 = sphi 0, %s41
    %s45 = sphi 0, %s44
    %s61 = sphi 0, %s45
    %s67 = sphi 0, %s69
    %s70 = sphi 0, %s67
    %s71 = sphi 0, %s70
    %s87 = sphi 0, %s71
    %s93 = sphi 0, %s95
    %s96 = sphi 0, %s93
    %s97 = sphi 0, %s96
    %s113 = sphi 0, %s97
  $region4: #{_ap2_update.1} parent=0 // loop_header_branch
    %13 = sbr.rel (%p11) target = $region8
  $region5: #{_ap2_update.1} parent=0 // loop_body
    %s15 = ssub.s32 %s10, 1
    %s16 = ssub.s32 %s10, 2
    %s17 = sadd.s32 %s10, 1
    %s19 = sadd.s32 %s18, 1
    %p22 = scmp.eq.s32.totalorder %s10, 1
    %p23 = scmp.ne.s32.totalorder %s18, %s20
    %p24 = scmp.eq.s32.totalorder %s10, 0
    %p25 = por %p23, %p24
    %p26 = scmp.ne.s32.totalorder %s18, %s20
    %p27 = scmp.eq.s32.totalorder %s15, 1
    %p28 = por %p26, %p27
    %p29 = scmp.ne.s32.totalorder %s20, %s21
    %p30 = scmp.eq.s32.totalorder %s15, 0
    %p31 = por %p29, %p30
    %p32 = scmp.ne.s32.totalorder %s20, %s21
    %p33 = scmp.eq.s32.totalorder %s16, 1
    %p34 = por %p32, %p33
    %p36 = scmp.ne.s32.totalorder %s21, %s35
    %p37 = scmp.eq.s32.totalorder %s16, 0
    %p38 = por %p36, %p37
    %s39 = ssub.s32 %s10, %s17
    %p40 = scmp.eq.s32.totalorder %s39, 0
    %s42 = sadd.s32 %s41, 1
    %s43 = scalar_select %p40, %s41, %s42
    %p46 = pneg %p40
    %p47 = scmp.eq.s32.totalorder %s10, 1
    %p48 = por %p46, %p47
    %p49 = scmp.ne.s32.totalorder %s41, %s44
    %p50 = scmp.eq.s32.totalorder %s10, 0
    %p51 = por %p49, %p50
    %p52 = scmp.ne.s32.totalorder %s41, %s44
    %p53 = scmp.eq.s32.totalorder %s15, 1
    %p54 = por %p52, %p53
    %p55 = scmp.ne.s32.totalorder %s44, %s45
    %p56 = scmp.eq.s32.totalorder %s15, 0
    %p57 = por %p55, %p56
    %p58 = scmp.ne.s32.totalorder %s44, %s45
    %p59 = scmp.eq.s32.totalorder %s16, 1
    %p60 = por %p58, %p59
    %p62 = scmp.ne.s32.totalorder %s45, %s61
    %p63 = scmp.eq.s32.totalorder %s16, 0
    %p64 = por %p62, %p63
    %s65 = ssub.s32 %s10, %s17
    %p66 = scmp.eq.s32.totalorder %s65, 0
    %s68 = sadd.s32 %s67, 1
    %s69 = scalar_select %p66, %s67, %s68
    %p72 = pneg %p66
    %p73 = scmp.eq.s32.totalorder %s10, 1
    %p74 = por %p72, %p73
    %p75 = scmp.ne.s32.totalorder %s67, %s70
    %p76 = scmp.eq.s32.totalorder %s10, 0
    %p77 = por %p75, %p76
    %p78 = scmp.ne.s32.totalorder %s67, %s70
    %p79 = scmp.eq.s32.totalorder %s15, 1
    %p80 = por %p78, %p79
    %p81 = scmp.ne.s32.totalorder %s70, %s71
    %p82 = scmp.eq.s32.totalorder %s15, 0
    %p83 = por %p81, %p82
    %p84 = scmp.ne.s32.totalorder %s70, %s71
    %p85 = scmp.eq.s32.totalorder %s16, 1
    %p86 = por %p84, %p85
    %p88 = scmp.ne.s32.totalorder %s71, %s87
    %p89 = scmp.eq.s32.totalorder %s16, 0
    %p90 = por %p88, %p89
    %s91 = ssub.s32 %s10, %s17
    %p92 = scmp.eq.s32.totalorder %s91, 0
    %s94 = sadd.s32 %s93, 1
    %s95 = scalar_select %p92, %s93, %s94
    %p98 = pneg %p92
    %p99 = scmp.eq.s32.totalorder %s10, 1
    %p100 = por %p98, %p99
    %p101 = scmp.ne.s32.totalorder %s93, %s96
    %p102 = scmp.eq.s32.totalorder %s10, 0
    %p103 = por %p101, %p102
    %p104 = scmp.ne.s32.totalorder %s93, %s96
    %p105 = scmp.eq.s32.totalorder %s15, 1
    %p106 = por %p104, %p105
    %p107 = scmp.ne.s32.totalorder %s96, %s97
    %p108 = scmp.eq.s32.totalorder %s15, 0
    %p109 = por %p107, %p108
    %p110 = scmp.ne.s32.totalorder %s96, %s97
    %p111 = scmp.eq.s32.totalorder %s16, 1
    %p112 = por %p110, %p111
    %p114 = scmp.ne.s32.totalorder %s97, %s113
    %p115 = scmp.eq.s32.totalorder %s16, 0
    %p116 = por %p114, %p115
    %p117 = scmp.le.s32.totalorder 1, %s10
    %p118 = scmp.lt.s32.totalorder %s10, 3
    %p119 = pnand %p117, %p118
    %p120 = pneg %p119
    // Predicated region
    $region9: #{_ap2_update.1} parent=5 // pred_check
      _
    $region10: #{_ap2_update.1} parent=5 // pred_check_branch
      %122 = sbr.rel (%p119) target = $region12
    $region11: #{_ap2_update.1} parent=5 // pred_region
      %s123 = ssub.s32 %s10, 1
      // Predicated region
      $region13: #{_ap2_update.1} parent=11 // pred_check
        %p124 = pneg %p31
      $region14: #{_ap2_update.1} parent=11 // pred_check_branch
        %126 = sbr.rel (%p124) target = $region16
      $region15: #{_ap2_update.1} parent=11 // pred_region
        _
      $region16: #{_ap2_update.1} parent=11 // pred_fallthru
        _
    $region12: #{_ap2_update.1} parent=5 // pred_fallthru
      _
    %p127 = scmp.lt.s32.totalorder %s10, 2
    // Predicated region
    $region17: #{_ap2_update.1} parent=5 // pred_check
      %p128 = pneg %p127
    $region18: #{_ap2_update.1} parent=5 // pred_check_branch
      %130 = sbr.rel (%p128) target = $region20
    $region19: #{_ap2_update.1} parent=5 // pred_region
      // Predicated region
      $region21: #{_ap2_update.1} parent=19 // pred_check
        %p131 = pneg %p51
      $region22: #{_ap2_update.1} parent=19 // pred_check_branch
        %133 = sbr.rel (%p131) target = $region24
      $region23: #{_ap2_update.1} parent=19 // pred_region
        %p134 = scmp.lt.s32.totalorder %s10, 1
        %s135 = scalar_select %p134, %s10, 1
        %s136 = smul.addr %s135, 8
        %s137 = scalar_lea.vmem %s1, %s136
      $region24: #{_ap2_update.1} parent=19 // pred_fallthru
        _
      // Predicated region
      $region25: #{_ap2_update.1} parent=19 // pred_check
        %p138 = pneg %p77
      $region26: #{_ap2_update.1} parent=19 // pred_check_branch
        %140 = sbr.rel (%p138) target = $region28
      $region27: #{_ap2_update.1} parent=19 // pred_region
        %p141 = scmp.lt.s32.totalorder %s10, 1
        %s142 = scalar_select %p141, %s10, 1
        %s143 = smul.addr %s142, 8
        %s144 = scalar_lea.vmem %s2, %s143
      $region28: #{_ap2_update.1} parent=19 // pred_fallthru
        _
    $region20: #{_ap2_update.1} parent=5 // pred_fallthru
      _
    %p145 = scmp.le.s32.totalorder 1, %s10
    %p146 = scmp.lt.s32.totalorder %s10, 3
    %p147 = pnand %p145, %p146
    %p148 = pneg %p147
    // Predicated region
    $region29: #{_ap2_update.1} parent=5 // pred_check
      _
    $region30: #{_ap2_update.1} parent=5 // pred_check_branch
      %150 = sbr.rel (%p147) target = $region32
    $region31: #{_ap2_update.1} parent=5 // pred_region
      %s151 = ssub.s32 %s10, 1
      %p152 = pneg %p31
      %p153 = pneg %p28
      %p154 = scmp.lt.s32.totalorder %s15, 1
      %s155 = scalar_select %p154, %s15, 1
      %s156 = smul.addr %s155, 8
      %s157 = scalar_lea.vmem %s1, %s156
      %p158 = pneg %p57
      %p159 = pneg %p54
      %p160 = scmp.lt.s32.totalorder %s15, 1
      %s161 = scalar_select %p160, %s15, 1
      %s162 = smul.addr %s161, 8
      %s163 = scalar_lea.vmem %s2, %s162
      %p164 = pneg %p83
      %p165 = pneg %p80
      %p166 = pneg %p109
      %p167 = pneg %p106
      %p168 = scmp.lt.s32.totalorder %s15, 1
      %s169 = scalar_select %p168, %s15, 1
      %s170 = smul.addr %s169, 8
      %s171 = scalar_lea.vmem %s3, %s170
      %p172 = scmp.lt.s32.totalorder %s15, 1
      %s173 = scalar_select %p172, %s15, 1
      %s174 = smul.addr %s173, 8
      %s175 = scalar_lea.vmem %s1, %s174
      %p176 = scmp.lt.s32.totalorder %s15, 1
      %s177 = scalar_select %p176, %s15, 1
      %s178 = smul.addr %s177, 8
      %s179 = scalar_lea.vmem %s2, %s178
      %p180 = scmp.lt.s32.totalorder %s15, 1
      %s181 = scalar_select %p180, %s15, 1
      %s182 = smul.addr %s181, 8
      %s183 = scalar_lea.vmem %s3, %s182
      %s184 = sld [smem:[#allocation2]]
      %v185 = vld [vmem:[%s175] sm:$0xff]
      %v186 = vld [vmem:[%s179] sm:$0xff]
      %v187 = vstv %s184
      %v188 = vmul.f32 %v187, %v186
      %v189 = vsub.f32 %v185, %v188
      %190 = vst [vmem:[%s183] sm:$0xff] %v189
      %p191 = scmp.lt.s32.totalorder %s15, 1
      %s192 = scalar_select %p191, %s15, 1
      %s193 = smul.addr %s192, 8
      %s194 = scalar_lea.vmem %s3, %s193
      // Predicated region
      $region33: #{_ap2_update.1} parent=31 // pred_check
        %p195 = pneg %p106
      $region34: #{_ap2_update.1} parent=31 // pred_check_branch
        %197 = sbr.rel (%p195) target = $region36
      $region35: #{_ap2_update.1} parent=31 // pred_region
        _
      $region36: #{_ap2_update.1} parent=31 // pred_fallthru
        _
    $region32: #{_ap2_update.1} parent=5 // pred_fallthru
      _
    %p198 = scmp.le.s32.totalorder 2, %s10
    // Predicated region
    $region37: #{_ap2_update.1} parent=5 // pred_check
      %p199 = pneg %p198
    $region38: #{_ap2_update.1} parent=5 // pred_check_branch
      %201 = sbr.rel (%p199) target = $region40
    $region39: #{_ap2_update.1} parent=5 // pred_region
      %s202 = ssub.s32 %s10, 2
      // Predicated region
      $region41: #{_ap2_update.1} parent=39 // pred_check
        %p203 = pneg %p112
      $region42: #{_ap2_update.1} parent=39 // pred_check_branch
        %205 = sbr.rel (%p203) target = $region44
      $region43: #{_ap2_update.1} parent=39 // pred_region
        %p206 = scmp.lt.s32.totalorder %s16, 1
        %s207 = scalar_select %p206, %s16, 1
        %s208 = smul.addr %s207, 8
        %s209 = scalar_lea.vmem %s3, %s208
      $region44: #{_ap2_update.1} parent=39 // pred_fallthru
        _
    $region40: #{_ap2_update.1} parent=5 // pred_fallthru
      _
  $region6: #{_ap2_update.1} parent=0 // loop_footer
    %s14 = sadd.s32 1, %s10
  $region7: #{_ap2_update.1} parent=0 // loop_footer_branch
    %9 = sbr.rel target = $region3
  $region8: #{_ap2_update.1} parent=0 // loop_exit
    _

</llo_original>
